<compile_context>
chip_gen: v7x
topology: tpu7x:2x2x1
jax: 0.10.0
libtpu: 0.0.40
codegen_flags: <defaults>
</compile_context>

<pallas_src>
import functools

import jax
import jax.numpy as jnp
from jax.experimental import pallas as pl
from jax.experimental.pallas import tpu as pltpu


# ----------------------------------------------------------------------------- helpers

def _round_up(x, m):
    return (x + m - 1) // m * m


def _largest_tile(dim_padded, upper):
    """Largest multiple of 128 that divides `dim_padded` (itself a 128-multiple) and is <= upper."""
    upper = max(128, min(upper, dim_padded))
    t = (upper // 128) * 128
    while t >= 128:
        if dim_padded % t == 0:
            return t
        t -= 128
    return 128


def _chip_vmem_bytes():
    """Per-TensorCore VMEM capacity (64 MiB v7x, 128 MiB v5e/v6e); safe fallback if unqueryable."""
    default = 128 * 1024 * 1024
    try:
        info = pltpu.get_tpu_info()
    except Exception:
        return default
    for attr in ("vmem_capacity_bytes", "vmem_bytes", "vmem_size_bytes", "vmem_capacity"):
        v = getattr(info, attr, None)
        if v:
            try:
                return int(v)
            except (TypeError, ValueError):
                pass
    return default


_CHIP_VMEM = _chip_vmem_bytes()


def _vmem_footprint(tm, tn, tk, x_bytes, out_bytes, n_wbuf):
    x_tile = 2 * tm * tk * x_bytes      # double-buffered activation tiles
    w_tile = n_wbuf * tk * tn * 1       # int8 weight tiles
    sb_tile = 2 * tn * 4                # scale+bias block (tiny)
    acc = tm * tn * 4                   # f32 accumulator scratch
    out_tile = 2 * tm * tn * out_bytes  # double-buffered output tiles
    return x_tile + w_tile + sb_tile + acc + out_tile


def _weight_block_spec(tk, tn, extra_buffering):
    """Int8 weight spec; 3-deep pipelining when weight-streaming bound (guarded for API drift)."""
    idx = lambda i, j, k: (k, j)
    if extra_buffering:
        try:
            return pl.BlockSpec((tk, tn), idx, pipeline_mode=pl.Buffered(3))
        except Exception:
            pass
    return pl.BlockSpec((tk, tn), idx)


# ----------------------------------------------------------------------------- kernel

def _w8a16_linear_kernel(x_ref, w_ref, sb_ref, o_ref, acc_ref):
    """x_ref: (tm, tk) activations; w_ref: (tk, tn) int8 weights (pre-transposed [K, N]);
    sb_ref: (2, tn) f32 [scale; bias]; o_ref: (tm, tn); acc_ref: (tm, tn) f32 scratch."""
    k = pl.program_id(2)

    @pl.when(k == 0)
    def _init():
        acc_ref[...] = jnp.zeros_like(acc_ref)

    # int8 -> bf16/f32 cast is exact (|w| <= 127); accumulate in f32 on the MXU.
    acc_ref[...] += jnp.dot(
        x_ref[...],
        w_ref[...].astype(x_ref.dtype),
        preferred_element_type=jnp.float32,
    )

    @pl.when(k == pl.num_programs(2) - 1)
    def _finalize():
        # Per-output-column (= per weight row) scale factors out of the K-sum.
        scale = sb_ref[0:1, :]
        bias = sb_ref[1:2, :]
        o_ref[...] = (acc_ref[...] * scale + bias).astype(o_ref.dtype)


# ----------------------------------------------------------------------------- weight prep (one-time)

def prepare_w8a16_weights(weight_i8, weight_scale, bias=None):
    """One-time preparation (do this at load time, NOT per forward):
       * int8 weight (N, K) -> transposed + padded (Kp, Np) so the MXU consumes it directly.
       * per-row scale + bias -> single lane-dense (2, Np) f32 array [scale_row; bias_row]."""
    N, K = weight_i8.shape
    Kp = _round_up(K, 128)
    Np = _round_up(N, 128)
    w_t = jnp.pad(weight_i8.T, ((0, Kp - K), (0, Np - N)))
    scale_row = weight_scale.reshape(1, N).astype(jnp.float32)
    if bias is None:
        bias_row = jnp.zeros((1, N), jnp.float32)
    else:
        bias_row = bias.reshape(1, N).astype(jnp.float32)
    sb = jnp.pad(jnp.concatenate([scale_row, bias_row], axis=0), ((0, 0), (0, Np - N)))
    return w_t, sb


# ----------------------------------------------------------------------------- forward

@functools.partial(jax.jit, static_argnames=("out_features", "tm", "tn", "tk"))
def w8a16_linear_prepared(x, w_t, sb, *, out_features, tm=None, tn=None, tk=None):
    """x: (..., K); w_t: (Kp, Np) int8 (prepared); sb: (2, Np) f32 [scale; bias].
    Returns (..., out_features) in x.dtype, matching F.linear(x, int8_w * scale, bias)."""
    orig_shape = x.shape
    K = orig_shape[-1]
    Kp, Np = w_t.shape
    N = out_features
    x2d = x.reshape(-1, K)
    M = x2d.shape[0]
    x_bytes = x2d.dtype.itemsize
    out_bytes = x_bytes

    # ---- generation-aware VMEM budget (v7x: 64 MiB/TC, v5e/v6e: 128 MiB) ----
    vmem_cap = min(_CHIP_VMEM * 5 // 8, 96 * 1024 * 1024)   # ~40 MiB on v7x, ~80 MiB on v5e/v6e
    budget = vmem_cap // 2

    # ---- tile selection (all static Python ints under jit) ----
    # tm: multiples of 16 (bf16 sublane packing); large for prefill, M-sized for decode.
    if tm is None:
        tm_sel = min(1024 if M >= 1024 else 512, _round_up(M, 16))
    else:
        tm_sel = min(tm, _round_up(M, 16))
    tm_sel = max(8, _round_up(tm_sel, 8))

    # tn: lane-dense, biggest 128-multiple divisor of Np up to 512 (or user override).
    tn_sel = _largest_tile(Np, tn if tn is not None else 512)

    # tk: full-K single-step config when it fits the budget; otherwise the largest that does.
    if tk is not None:
        tk_sel = _largest_tile(Kp, tk)
    else:
        tk_sel = 128
        for cand in (Kp, 2048, 1024, 512, 256, 128):
            c = _largest_tile(Kp, cand)
            if _vmem_footprint(tm_sel, tn_sel, c, x_bytes, out_bytes, 2) <= budget:
                tk_sel = c
                break

    Mp = _round_up(M, tm_sel)

    # v7x megacore: keep >= 2 parallel tiles when M collapses to a single tile.
    if tm is None and tn is None and Mp // tm_sel == 1 and Np // tn_sel == 1 and Np >= 256:
        tn_sel = _largest_tile(Np, Np // 2)

    n_k = Kp // tk_sel
    decode_like = (Mp // tm_sel == 1)
    extra_wbuf = decode_like and n_k >= 3   # weight-streaming bound: 3-deep weight pipeline

    grid = (Mp // tm_sel, Np // tn_sel, n_k)

    # ---- pad activations per call (zero K-padding contributes 0 to the dot product) ----
    pad_m, pad_k = Mp - M, Kp - K
    x_p = jnp.pad(x2d, ((0, pad_m), (0, pad_k))) if (pad_m or pad_k) else x2d

    # ---- VMEM limit: ~2x the computed footprint, well below chip capacity ----
    fp = _vmem_footprint(tm_sel, tn_sel, tk_sel, x_bytes, out_bytes, 3 if extra_wbuf else 2)
    vmem_limit = max(2 * fp, 16 * 1024 * 1024)
    vmem_limit = min(vmem_limit, vmem_cap)
    vmem_limit = max(vmem_limit, fp + (2 << 20))
    vmem_limit = int(min(vmem_limit, _CHIP_VMEM * 7 // 8))

    # Advisory cost hint (accounts for re-streaming across M / N tiles).
    cost = pl.CostEstimate(
        flops=2 * Mp * Np * Kp,
        transcendentals=0,
        bytes_accessed=(Mp * Kp * x_bytes) * (Np // tn_sel)
        + (Kp * Np) * (Mp // tm_sel)
        + Mp * Np * out_bytes
        + 2 * Np * 4,
    )

    out = pl.pallas_call(
        _w8a16_linear_kernel,
        out_shape=jax.ShapeDtypeStruct((Mp, Np), x.dtype),
        grid_spec=pltpu.PrefetchScalarGridSpec(
            num_scalar_prefetch=0,
            grid=grid,
            in_specs=[
                pl.BlockSpec((tm_sel, tk_sel), lambda i, j, k: (i, k)),   # activations
                _weight_block_spec(tk_sel, tn_sel, extra_wbuf),           # int8 weights [K, N]
                pl.BlockSpec((2, tn_sel), lambda i, j, k: (0, j)),        # [scale; bias] rows
            ],
            out_specs=pl.BlockSpec((tm_sel, tn_sel), lambda i, j, k: (i, j)),
            scratch_shapes=[pltpu.VMEM((tm_sel, tn_sel), jnp.float32)],
        ),
        compiler_params=pltpu.CompilerParams(
            dimension_semantics=("parallel", "parallel", "arbitrary"),
            vmem_limit_bytes=vmem_limit,
        ),
        cost_estimate=cost,
    )(x_p, w_t, sb)

    return out[:M, :N].reshape(*orig_shape[:-1], N)


def w8a16_linear(x, weight_i8, weight_scale, bias=None, **tile_overrides):
    """Convenience path: prepares weights per call (slow). Prefer prepare_w8a16_weights() once
    at load time + w8a16_linear_prepared() in the hot path."""
    w_t, sb = prepare_w8a16_weights(weight_i8, weight_scale, bias)
    return w8a16_linear_prepared(x, w_t, sb, out_features=weight_i8.shape[0], **tile_overrides)


# ----------------------------------------------------------------------------- quantization + reference

def quantize_weights(w_fp32):
    """Per-output-row abs-max int8 quantization (group_size=None path of the module)."""
    scales = jnp.max(jnp.abs(w_fp32), axis=-1, keepdims=True) / 127.0
    scales = jnp.clip(scales, 1e-8)
    int8_w = jnp.clip(jnp.round(w_fp32 / scales), -127, 127).astype(jnp.int8)
    return int8_w, scales.astype(jnp.bfloat16)


def _reference(x2d, weight_i8, weight_scale, bias):
    """Pure-JAX reference of the module's forward (dequant to bf16, then linear), in f32."""
    w_deq = weight_i8.astype(jnp.bfloat16) * weight_scale.astype(jnp.bfloat16)
    y = jnp.dot(x2d.astype(jnp.float32), w_deq.astype(jnp.float32).T)
    if bias is not None:
        y = y + bias.astype(jnp.float32)
    return y.astype(x2d.dtype)


# ----------------------------------------------------------------------------- tests

if __name__ == "__main__":
    # --- Test 1: small shapes matching the module (batch=2, seq=8, in=32, out=64) ---
    B, S, K, N = 2, 8, 32, 64
    kx, kw, kb = jax.random.split(jax.random.PRNGKey(0), 3)
    w_fp32 = jax.random.normal(kw, (N, K), dtype=jnp.float32) * 0.1
    bias = (jax.random.normal(kb, (N,), dtype=jnp.float32) * 0.1).astype(jnp.bfloat16)
    w_i8, w_scale = quantize_weights(w_fp32)
    x = jax.random.normal(kx, (B, S, K), dtype=jnp.float32).astype(jnp.bfloat16)

    w_t, sb = prepare_w8a16_weights(w_i8, w_scale, bias)           # one-time weight prep
    y = jax.block_until_ready(w8a16_linear_prepared(x, w_t, sb, out_features=N))
    y_ref = _reference(x.reshape(-1, K), w_i8, w_scale, bias).reshape(B, S, N)
    assert y.shape == (B, S, N) and y.dtype == jnp.bfloat16
    assert jnp.allclose(y.astype(jnp.float32), y_ref.astype(jnp.float32), atol=2e-2, rtol=2e-2)

    # --- Test 2: force the multi-N-tile / K-accumulation / Buffered-weight decode path ---
    B2, S2, K2, N2 = 2, 8, 512, 256
    kx2, kw2, kb2 = jax.random.split(jax.random.PRNGKey(1), 3)
    w2_fp32 = jax.random.normal(kw2, (N2, K2), dtype=jnp.float32) * 0.05
    bias2 = (jax.random.normal(kb2, (N2,), dtype=jnp.float32) * 0.05).astype(jnp.bfloat16)
    w2_i8, w2_scale = quantize_weights(w2_fp32)
    x2 = jax.random.normal(kx2, (B2, S2, K2), dtype=jnp.float32).astype(jnp.bfloat16)

    w2_t, sb2 = prepare_w8a16_weights(w2_i8, w2_scale, bias2)
    y2 = jax.block_until_ready(
        w8a16_linear_prepared(x2, w2_t, sb2, out_features=N2, tn=128, tk=128))
    y2_ref = _reference(x2.reshape(-1, K2), w2_i8, w2_scale, bias2).reshape(B2, S2, N2)
    assert y2.shape == (B2, S2, N2) and y2.dtype == jnp.bfloat16
    assert jnp.allclose(y2.astype(jnp.float32), y2_ref.astype(jnp.float32), atol=5e-2, rtol=5e-2)

    # --- Test 3: auto tile selection (full-K resident path), no bias ---
    B3, S3, K3, N3 = 4, 64, 1024, 768
    kx3, kw3 = jax.random.split(jax.random.PRNGKey(2), 2)
    w3_fp32 = jax.random.normal(kw3, (N3, K3), dtype=jnp.float32) * 0.05
    w3_i8, w3_scale = quantize_weights(w3_fp32)
    x3 = jax.random.normal(kx3, (B3, S3, K3), dtype=jnp.float32).astype(jnp.bfloat16)

    w3_t, sb3 = prepare_w8a16_weights(w3_i8, w3_scale, None)
    y3 = jax.block_until_ready(w8a16_linear_prepared(x3, w3_t, sb3, out_features=N3))
    y3_ref = _reference(x3.reshape(-1, K3), w3_i8, w3_scale, None).reshape(B3, S3, N3)
    assert y3.shape == (B3, S3, N3) and y3.dtype == jnp.bfloat16
    assert jnp.allclose(y3.astype(jnp.float32), y3_ref.astype(jnp.float32), atol=5e-2, rtol=5e-2)

    print("KERNEL_OK")
</pallas_src>

<mosaic_0001>
module attributes {stable_mosaic.version = 11 : i64} {
  func.func @_w8a16_linear_kernel(%arg0: i32, %arg1: i32, %arg2: i32, %arg3: memref<16x128xbf16, #tpu.memory_space<vmem>>, %arg4: memref<128x128xi8, #tpu.memory_space<vmem>>, %arg5: memref<2x128xf32, #tpu.memory_space<vmem>>, %arg6: memref<16x128xbf16, #tpu.memory_space<vmem>>, %arg7: memref<16x128xf32, #tpu.memory_space<vmem>>) attributes {dimension_semantics = [#tpu.dimension_semantics<parallel>, #tpu.dimension_semantics<parallel>, #tpu.dimension_semantics<arbitrary>], iteration_bounds = array<i64: 1, 1, 1>, scalar_prefetch = 0 : i64, scratch_operands = 1 : i64, tpu.core_type = #tpu.core_type<tc>, window_params = [{transform_indices = @transform_0, window_bounds = array<i64: 16, 128>}, {transform_indices = @transform_1, window_bounds = array<i64: 128, 128>}, {transform_indices = @transform_2, window_bounds = array<i64: 2, 128>}, {transform_indices = @transform_3, window_bounds = array<i64: 16, 128>}]} {
    %c0_i32 = arith.constant 0 : i32
    %0 = arith.cmpi eq, %arg2, %c0_i32 : i32
    %1 = arith.extui %0 : i1 to i32
    %c0_i32_0 = arith.constant 0 : i32
    %2 = arith.cmpi ne, %1, %c0_i32_0 : i32
    scf.if %2 {
      %cst_10 = arith.constant 0.000000e+00 : f32
      %13 = vector.broadcast %cst_10 : f32 to vector<16x128xf32>
      %c0_11 = arith.constant 0 : index
      %c0_12 = arith.constant 0 : index
      %14 = vector.load %arg7[%c0_11, %c0_12] : memref<16x128xf32, #tpu.memory_space<vmem>>, vector<16x128xf32>
      tpu.vector_store %arg7[%c0_11, %c0_12], %13 {strides = array<i32>} : memref<16x128xf32, #tpu.memory_space<vmem>>, vector<16x128xf32>,
    } else {
    }
    %c0 = arith.constant 0 : index
    %c0_1 = arith.constant 0 : index
    %3 = vector.load %arg7[%c0, %c0_1] : memref<16x128xf32, #tpu.memory_space<vmem>>, vector<16x128xf32>
    %c0_2 = arith.constant 0 : index
    %c0_3 = arith.constant 0 : index
    %4 = vector.load %arg3[%c0_2, %c0_3] : memref<16x128xbf16, #tpu.memory_space<vmem>>, vector<16x128xbf16>
    %c0_4 = arith.constant 0 : index
    %c0_5 = arith.constant 0 : index
    %5 = vector.load %arg4[%c0_4, %c0_5] : memref<128x128xi8, #tpu.memory_space<vmem>>, vector<128x128xi8>
    %6 = arith.sitofp %5 : vector<128x128xi8> to vector<128x128xbf16>
    %cst = arith.constant dense<0.000000e+00> : vector<16x128xf32>
    %7 = tpu.matmul %4, %6, %cst {dimension_numbers = #tpu.dot_dimension_numbers<[1], [0], [0], [1], [0, 0, 1, 1], [], []>} : vector<16x128xbf16>, vector<128x128xbf16>, vector<16x128xf32> -> vector<16x128xf32>
    %8 = arith.addf %3, %7 : vector<16x128xf32>
    %c0_6 = arith.constant 0 : index
    %c0_7 = arith.constant 0 : index
    %9 = vector.load %arg7[%c0_6, %c0_7] : memref<16x128xf32, #tpu.memory_space<vmem>>, vector<16x128xf32>
    tpu.vector_store %arg7[%c0_6, %c0_7], %8 {strides = array<i32>} : memref<16x128xf32, #tpu.memory_space<vmem>>, vector<16x128xf32>,
    %c0_i32_8 = arith.constant 0 : i32
    %10 = arith.cmpi eq, %arg2, %c0_i32_8 : i32
    %11 = arith.extui %10 : i1 to i32
    %c0_i32_9 = arith.constant 0 : i32
    %12 = arith.cmpi ne, %11, %c0_i32_9 : i32
    scf.if %12 {
      %c0_10 = arith.constant 0 : index
      %c0_11 = arith.constant 0 : index
      %13 = vector.load %arg5[%c0_10, %c0_11] : memref<2x128xf32, #tpu.memory_space<vmem>>, vector<1x128xf32>
      %c1 = arith.constant 1 : index
      %c0_12 = arith.constant 0 : index
      %14 = vector.load %arg5[%c1, %c0_12] : memref<2x128xf32, #tpu.memory_space<vmem>>, vector<1x128xf32>
      %c0_13 = arith.constant 0 : index
      %c0_14 = arith.constant 0 : index
      %15 = vector.load %arg7[%c0_13, %c0_14] : memref<16x128xf32, #tpu.memory_space<vmem>>, vector<16x128xf32>
      %16 = vector.broadcast %13 : vector<1x128xf32> to vector<16x128xf32>
      %17 = arith.mulf %15, %16 : vector<16x128xf32>
      %18 = vector.broadcast %14 : vector<1x128xf32> to vector<16x128xf32>
      %19 = arith.addf %17, %18 : vector<16x128xf32>
      %20 = arith.truncf %19 : vector<16x128xf32> to vector<16x128xbf16>
      %c0_15 = arith.constant 0 : index
      %c0_16 = arith.constant 0 : index
      %21 = vector.load %arg6[%c0_15, %c0_16] : memref<16x128xbf16, #tpu.memory_space<vmem>>, vector<16x128xbf16>
      tpu.vector_store %arg6[%c0_15, %c0_16], %20 {strides = array<i32>} : memref<16x128xbf16, #tpu.memory_space<vmem>>, vector<16x128xbf16>,
    } else {
    }
    return
  }
  func.func @transform_0(%arg0: i32, %arg1: i32, %arg2: i32) -> (i32, i32) {
    %c0_i32 = arith.constant 0 : i32
    return %arg0, %arg2 : i32, i32
  }
  func.func @transform_1(%arg0: i32, %arg1: i32, %arg2: i32) -> (i32, i32) {
    %c0_i32 = arith.constant 0 : i32
    return %arg2, %arg1 : i32, i32
  }
  func.func @transform_2(%arg0: i32, %arg1: i32, %arg2: i32) -> (i32, i32) {
    %c0_i32 = arith.constant 0 : i32
    %c0_i32_0 = arith.constant 0 : i32
    return %c0_i32, %arg1 : i32, i32
  }
  func.func @transform_3(%arg0: i32, %arg1: i32, %arg2: i32) -> (i32, i32) {
    %c0_i32 = arith.constant 0 : i32
    return %arg0, %arg1 : i32, i32
  }
}

</mosaic_0001>

<llo_original>
// kernel: w8a16_linear_prepared.1
$region0: #{w8a16_linear_prepared.1}
  #allocation0 [shape = 'u32[]', space=smem, size = 0x4, offset = 0x4, fixed_abs, tag = 'smem constant byte address 0x4 - core index']
  #allocation1 [shape = 'u32[144,128]{1,0:T(1,128)}', space=vmem, size = 0x12000, scoped, tag = 'internal scratch']
  #allocation2 [shape = 'f32[16,128]{1,0:T(8,128)}', space=vmem, size = 0x2000, scoped, tag = 'scratch operand']
  %s0 = inlined_call_operand.vmem [shape: bf16[16,128], index: 0, kind: input, shape index: {}]
  %s1 = inlined_call_operand.hbm [shape: s8[128,128], index: 1, kind: input, shape index: {}]
  %s2 = inlined_call_operand.vmem [shape: f32[2,128], index: 2, kind: input, shape index: {}]
  %s3 = inlined_call_operand.vmem [shape: bf16[16,128], index: 3, kind: output, shape index: {}]
  %s4 = sld [smem:[#allocation0]]
  $region34: #{w8a16_linear_prepared.1} parent=0
    _
  %s6 = ssub.s32 1, %s4
  %s7 = scalar_select 0, %s6, %s4
  $region1: #{w8a16_linear_prepared.1} parent=0
    #allocation3 [shape = 'u8[16384]{0}', space=vmem, size = 0x4000, scoped, tag = 'input window, operand 1, single buffered']
    #allocation4 [shape = 's32[1]{0}', space=sflag, size = 0x4, scoped, tag = 'scoped memory for w8a16_linear_prepared.1']
    %8 = vsyncpa [#allocation4], 0
    // Predicated region
    $region2: #{w8a16_linear_prepared.1} parent=1 // pred_check
      _
    $region3: #{w8a16_linear_prepared.1} parent=1 // pred_check_branch
      %10 = sbr.rel (0) target = $region5
    $region4: #{w8a16_linear_prepared.1} parent=1 // pred_region
      _
    $region5: #{w8a16_linear_prepared.1} parent=1 // pred_fallthru
      _
    // Predicated region
    $region6: #{w8a16_linear_prepared.1} parent=1 // pred_check
      _
    $region7: #{w8a16_linear_prepared.1} parent=1 // pred_check_branch
      %12 = sbr.rel (0) target = $region9
    $region8: #{w8a16_linear_prepared.1} parent=1 // pred_region
      %s14 = ssub.s32 512, 512
      %15 = vsyncadd [#allocation4], %s14
      %s16 = sshll.u32 [#allocation3], 4
      %s17 = int_to_ptr.vmem [resolvable:$true] %s16
      %22 = dma.hbm_to_vmem [thread:$0]  %s1, 512, %s17, [#allocation4], 128, 128, 8
    $region9: #{w8a16_linear_prepared.1} parent=1 // pred_fallthru
      _
    // Predicated region
    $region10: #{w8a16_linear_prepared.1} parent=1 // pred_check
      _
    $region11: #{w8a16_linear_prepared.1} parent=1 // pred_check_branch
      %24 = sbr.rel (0) target = $region13
    $region12: #{w8a16_linear_prepared.1} parent=1 // pred_region
      _
    $region13: #{w8a16_linear_prepared.1} parent=1 // pred_fallthru
      _
    // Predicated region
    $region14: #{w8a16_linear_prepared.1} parent=1 // pred_check
      _
    $region15: #{w8a16_linear_prepared.1} parent=1 // pred_check_branch
      %26 = sbr.rel (0) target = $region17
    $region16: #{w8a16_linear_prepared.1} parent=1 // pred_region
      %27 = dma.done [#allocation4], 512
    $region17: #{w8a16_linear_prepared.1} parent=1 // pred_fallthru
      _
    %p29 = scmp.eq.s32.totalorder 0, 0
    // Predicated region
    $region18: #{w8a16_linear_prepared.1} parent=1 // pred_check
      %p30 = pneg %p29
    $region19: #{w8a16_linear_prepared.1} parent=1 // pred_check_branch
      %32 = sbr.rel (%p30) target = $region21
    $region20: #{w8a16_linear_prepared.1} parent=1 // pred_region
      %33 = vst [vmem:[#allocation2] sm:$0xff] 0.0
      %34 = vst [vmem:[#allocation2 + $0x8] sm:$0xff] 0.0
    $region21: #{w8a16_linear_prepared.1} parent=1 // pred_fallthru
      _
    %v35 = vld [vmem:[#allocation2] sm:$0xff]
    %v36 = vld [vmem:[#allocation2 + $0x8] sm:$0xff]
    %v37 = vld [vmem:[%s0] sm:$0xf]
    %v38 = vld [vmem:[%s0 + $0x4] sm:$0xf]
    %v39 = vld [vmem:[#allocation3] sm:$0xff]
    %v40 = vld [vmem:[#allocation3 + $0x8] sm:$0xff]
    %v41 = vld [vmem:[#allocation3 + $0x10] sm:$0xff]
    %v42 = vld [vmem:[#allocation3 + $0x18] sm:$0xff]
    %v43 = vunpack.c.l.s8.bf16 %v39
    %v44 = vunpack.c.h.s8.bf16 %v39
    %v45 = vunpack.c.l.s8.bf16 %v40
    %v46 = vunpack.c.h.s8.bf16 %v40
    %v47 = vunpack.c.l.s8.bf16 %v41
    %v48 = vunpack.c.h.s8.bf16 %v41
    %v49 = vunpack.c.l.s8.bf16 %v42
    %v50 = vunpack.c.h.s8.bf16 %v42
    %v53 = vunpack.c.l.b16 %v37
    %v54 = vunpack.c.l.b16 %v38
    %v55 = vpack.c.b16 %v54, %v53
    %57 = vmatprep.subr.bf16.mxu0 0
    %58 = vmatpush1.bf16.msra.mxu0 %v43
    %59 = vmatprep.subr.bf16.mxu0 0
    %60 = vmatpush1.bf16.msra.mxu0 %v44
    %61 = vmatprep.subr.bf16.mxu0 0
    %62 = vmatpush1.bf16.msra.mxu0 %v45
    %63 = vmatprep.subr.bf16.mxu0 0
    %64 = vmatpush1.bf16.msra.mxu0 %v46
    %65 = vmatprep.subr.bf16.mxu0 0
    %66 = vmatpush1.bf16.msra.mxu0 %v47
    %67 = vmatprep.subr.bf16.mxu0 0
    %68 = vmatpush1.bf16.msra.mxu0 %v48
    %69 = vmatprep.subr.bf16.mxu0 0
    %70 = vmatpush1.bf16.msra.mxu0 %v49
    %71 = vmatprep.subr.bf16.mxu0 0
    %72 = vmatpush1.bf16.msra.mxu0 %v50
    %73 = vmatprep.subr.bf16.mxu0 0
    %74 = vmatpush1.bf16.msra.mxu0 0
    %75 = vmatprep.subr.bf16.mxu0 0
    %76 = vmatpush1.bf16.msra.mxu0 0
    %77 = vmatprep.subr.bf16.mxu0 0
    %78 = vmatpush1.bf16.msra.mxu0 0
    %79 = vmatprep.subr.bf16.mxu0 0
    %80 = vmatpush1.bf16.msra.mxu0 0
    %81 = vmatprep.subr.bf16.mxu0 0
    %82 = vmatpush1.bf16.msra.mxu0 0
    %83 = vmatprep.subr.bf16.mxu0 0
    %84 = vmatpush1.bf16.msra.mxu0 0
    %85 = vmatprep.subr.bf16.mxu0 0
    %86 = vmatpush1.bf16.msra.mxu0 0
    %87 = vmatprep.subr.bf16.mxu0 0
    %88 = vmatpush1.bf16.msra.mxu0 0
    %89 = vmatprep.mubr.bf16.mxu0 0
    %90 = vmatmul.mubr.bf16.gmra.mrb[0].mxu0 %v55
    %v91 = vpop.f32.mrb[0].mxu0
    %v92 = vadd.f32 0.0, %v91
    %v93 = vpop.f32.mrb[0].mxu0
    %v94 = vpop.f32.mrb[0].mxu0
    %v95 = vadd.f32 0.0, %v94
    %v96 = vpop.f32.mrb[0].mxu0
    %97 = vdwg.mxu0
    %v98 = vadd.f32 %v35, %v92
    %v99 = vadd.f32 %v36, %v95
    %100 = vst [vmem:[#allocation2] sm:$0xff] %v98
    %101 = vst [vmem:[#allocation2 + $0x8] sm:$0xff] %v99
    // Predicated region
    $region22: #{w8a16_linear_prepared.1} parent=1 // pred_check
      %p102 = pneg %p29
    $region23: #{w8a16_linear_prepared.1} parent=1 // pred_check_branch
      %104 = sbr.rel (%p102) target = $region25
    $region24: #{w8a16_linear_prepared.1} parent=1 // pred_region
      %v105 = vld [vmem:[%s2] sm:$0x1]
      %v106 = vld [vmem:[%s2 + $0x1] sm:$0x1]
      %v107 = vld [vmem:[#allocation2] sm:$0xff]
      %v108 = vld [vmem:[#allocation2 + $0x8] sm:$0xff]
      %v109 = vlaneseq
      %v110 = vshrl.u32 %v109, 7
      %v111 = vsub.s32 0, %v110
      %v112 = vrot.slane %v105, %v111
      %v113 = vmul.f32 %v107, %v112
      %v114 = vmul.f32 %v108, %v112
      %v115 = vlaneseq
      %v116 = vshrl.u32 %v115, 7
      %v117 = vsub.s32 0, %v116
      %v118 = vrot.slane %v106, %v117
      %v119 = vadd.f32 %v113, %v118
      %v120 = vadd.f32 %v114, %v118
      %v121 = vpack.c.bf16 %v120, %v119
      %v123 = vunpack.c.l.b16 %v121
      %v124 = vunpack.c.h.b16 %v121
      %v125 = vpack.c.b16 %v123, %v123
      %v126 = vpack.c.b16 %v124, %v124
      %129 = vst [vmem:[%s3] sm:$0xf] %v125
      %130 = vst [vmem:[%s3 + $0x4] sm:$0xf] %v126
    $region25: #{w8a16_linear_prepared.1} parent=1 // pred_fallthru
      _
    // Predicated region
    $region26: #{w8a16_linear_prepared.1} parent=1 // pred_check
      _
    $region27: #{w8a16_linear_prepared.1} parent=1 // pred_check_branch
      %132 = sbr.rel (0) target = $region29
    $region28: #{w8a16_linear_prepared.1} parent=1 // pred_region
      _
    $region29: #{w8a16_linear_prepared.1} parent=1 // pred_fallthru
      _
    // Predicated region
    $region30: #{w8a16_linear_prepared.1} parent=1 // pred_check
      _
    $region31: #{w8a16_linear_prepared.1} parent=1 // pred_check_branch
      %134 = sbr.rel (0) target = $region33
    $region32: #{w8a16_linear_prepared.1} parent=1 // pred_region
      _
    $region33: #{w8a16_linear_prepared.1} parent=1 // pred_fallthru
      _
    %135 = vsyncpa [#allocation4], 1

</llo_original>
